<compile_context>
chip_gen: v7x
topology: tpu7x:2x2x1
jax: 0.10.0
libtpu: 0.0.40
codegen_flags: <defaults>
</compile_context>

<pallas_src>
import functools

import jax
import jax.numpy as jnp
from jax.experimental import pallas as pl
from jax.experimental.pallas import tpu as pltpu

LANE = 128
SUBLANE = 8


def _round_up(n, m):
    return ((n + m - 1) // m) * m


def net_kernel(x_ref, w1_ref, b1_ref, w2_ref, b2_ref, o_ref, *, n_hidden):
    # hidden = relu(x @ W1 + b1)   (bf16 operands, f32 accumulation)
    h = jnp.dot(x_ref[...], w1_ref[...],
                preferred_element_type=jnp.float32) + b1_ref[...]
    h = jnp.maximum(h, 0.0)

    # dropout (p=0.1) -> identity at inference

    # Mask padded hidden lanes so they contribute 0 to the softmax (dim=1).
    h_pad = h.shape[1]
    if h_pad != n_hidden:
        lane = jax.lax.broadcasted_iota(jnp.int32, h.shape, 1)
        h = jnp.where(lane < n_hidden, h, -jnp.inf)

    # softmax over the hidden axis (dim=1), lane-dense (H padded to 128-mult).
    m = jnp.max(h, axis=1, keepdims=True)
    e = jnp.exp(h - m)
    s = e * pl.reciprocal(jnp.sum(e, axis=1, keepdims=True), approx=True)

    # classifier = s @ W2 + b2
    o = jnp.dot(s.astype(jnp.bfloat16), w2_ref[...],
                preferred_element_type=jnp.float32) + b2_ref[...]
    o_ref[...] = o.astype(o_ref.dtype)


def net_forward(x, w1, b1, w2, b2, *, block_b=512):
    """x: [B, F] f32; w1: [F, H]; b1: [1, H]; w2: [H, O]; b2: [1, O] (all f32)."""
    B, F = x.shape
    H = w1.shape[1]
    O = w2.shape[1]

    # Lane-pad everything to multiples of 128; sublane-pad batch to the tile.
    F_pad = _round_up(F, LANE)
    H_pad = _round_up(H, LANE)
    O_pad = _round_up(O, LANE)
    # Batch tile: big enough to amortize per-grid-step overhead, small enough
    # to fit comfortably in VMEM on every generation (incl. v7x's 64 MiB).
    TB = min(block_b, _round_up(B, SUBLANE))
    B_pad = _round_up(B, TB)

    # Pad + cast once in the wrapper (weights/bias padding is math-neutral:
    # zero rows/cols of W, zero bias, and padded hidden lanes are masked).
    xp = jnp.zeros((B_pad, F_pad), jnp.bfloat16).at[:B, :F].set(
        x.astype(jnp.bfloat16))
    w1p = jnp.zeros((F_pad, H_pad), jnp.bfloat16).at[:F, :H].set(
        w1.astype(jnp.bfloat16))
    b1p = jnp.zeros((1, H_pad), jnp.float32).at[:, :H].set(b1)
    w2p = jnp.zeros((H_pad, O_pad), jnp.bfloat16).at[:H, :O].set(
        w2.astype(jnp.bfloat16))
    b2p = jnp.zeros((1, O_pad), jnp.float32).at[:, :O].set(b2)

    kernel = functools.partial(net_kernel, n_hidden=H)

    out_padded = pl.pallas_call(
        kernel,
        out_shape=jax.ShapeDtypeStruct((B_pad, O_pad), jnp.float32),
        grid=(B_pad // TB,),
        in_specs=[
            # x: tiled along the batch grid axis.
            pl.BlockSpec((TB, F_pad), lambda i: (i, 0)),
            # Weights / biases: index_map ignores i -> resident in VMEM,
            # DMA'd exactly once across the whole grid.
            pl.BlockSpec((F_pad, H_pad), lambda i: (0, 0)),
            pl.BlockSpec((1, H_pad), lambda i: (0, 0)),
            pl.BlockSpec((H_pad, O_pad), lambda i: (0, 0)),
            pl.BlockSpec((1, O_pad), lambda i: (0, 0)),
        ],
        out_specs=pl.BlockSpec((TB, O_pad), lambda i: (i, 0)),
        compiler_params=pltpu.CompilerParams(
            dimension_semantics=("parallel",)),
    )(xp, w1p, b1p, w2p, b2p)

    # Strip batch / output-lane padding.
    return out_padded[:B, :O]


def init_params(key, n_feature, n_hidden, n_out):
    """Deterministic init mimicking PyTorch nn.Linear default (U(-1/sqrt(fan_in), +))."""
    k1, k2, k3, k4 = jax.random.split(key, 4)
    lim1 = 1.0 / jnp.sqrt(n_feature)
    lim2 = 1.0 / jnp.sqrt(n_hidden)
    # store weights as [in, out] (transpose of PyTorch's [out, in])
    w1 = jax.random.uniform(k1, (n_feature, n_hidden), jnp.float32, -lim1, lim1)
    b1 = jax.random.uniform(k2, (1, n_hidden), jnp.float32, -lim1, lim1)
    w2 = jax.random.uniform(k3, (n_hidden, n_out), jnp.float32, -lim2, lim2)
    b2 = jax.random.uniform(k4, (1, n_out), jnp.float32, -lim2, lim2)
    return w1, b1, w2, b2


if __name__ == "__main__":
    n_feature, n_hidden, n_out = 32, 64, 16
    batch = 8

    key = jax.random.PRNGKey(0)
    kx, kp = jax.random.split(key)
    x = jax.random.normal(kx, (batch, n_feature), jnp.float32)
    w1, b1, w2, b2 = init_params(kp, n_feature, n_hidden, n_out)

    out = net_forward(x, w1, b1, w2, b2)
    jax.block_until_ready(out)

    # reference check in plain JAX (f32; kernel uses bf16 MXU inputs + approx
    # reciprocal, so tolerance is loosened accordingly)
    h = jnp.maximum(x @ w1 + b1, 0.0)
    s = jax.nn.softmax(h, axis=1)
    ref = s @ w2 + b2
    assert out.shape == (batch, n_out)
    assert jnp.allclose(out, ref, atol=1e-2, rtol=1e-2)

    print("KERNEL_OK")
</pallas_src>

<mosaic_0001>
module attributes {stable_mosaic.version = 11 : i64} {
  func.func @net_kernel(%arg0: i32, %arg1: memref<8x128xbf16, #tpu.memory_space<vmem>>, %arg2: memref<128x128xbf16, #tpu.memory_space<vmem>>, %arg3: memref<1x128xf32, #tpu.memory_space<vmem>>, %arg4: memref<128x128xbf16, #tpu.memory_space<vmem>>, %arg5: memref<1x128xf32, #tpu.memory_space<vmem>>, %arg6: memref<8x128xf32, #tpu.memory_space<vmem>>) attributes {dimension_semantics = [#tpu.dimension_semantics<parallel>], iteration_bounds = array<i64: 1>, scalar_prefetch = 0 : i64, scratch_operands = 0 : i64, tpu.core_type = #tpu.core_type<tc>, window_params = [{transform_indices = @transform_0, window_bounds = array<i64: 8, 128>}, {pipeline_mode = #tpu.pipeline_mode<synchronous>, transform_indices = @transform_1, window_bounds = array<i64: 128, 128>}, {pipeline_mode = #tpu.pipeline_mode<synchronous>, transform_indices = @transform_2, window_bounds = array<i64: 1, 128>}, {pipeline_mode = #tpu.pipeline_mode<synchronous>, transform_indices = @transform_3, window_bounds = array<i64: 128, 128>}, {pipeline_mode = #tpu.pipeline_mode<synchronous>, transform_indices = @transform_4, window_bounds = array<i64: 1, 128>}, {transform_indices = @transform_5, window_bounds = array<i64: 8, 128>}]} {
    %c0 = arith.constant 0 : index
    %c0_0 = arith.constant 0 : index
    %0 = vector.load %arg1[%c0, %c0_0] : memref<8x128xbf16, #tpu.memory_space<vmem>>, vector<8x128xbf16>
    %c0_1 = arith.constant 0 : index
    %c0_2 = arith.constant 0 : index
    %1 = vector.load %arg2[%c0_1, %c0_2] : memref<128x128xbf16, #tpu.memory_space<vmem>>, vector<128x128xbf16>
    %cst = arith.constant dense<0.000000e+00> : vector<8x128xf32>
    %2 = tpu.matmul %0, %1, %cst {dimension_numbers = #tpu.dot_dimension_numbers<[1], [0], [0], [1], [0, 0, 1, 1], [], []>} : vector<8x128xbf16>, vector<128x128xbf16>, vector<8x128xf32> -> vector<8x128xf32>
    %c0_3 = arith.constant 0 : index
    %c0_4 = arith.constant 0 : index
    %3 = vector.load %arg3[%c0_3, %c0_4] : memref<1x128xf32, #tpu.memory_space<vmem>>, vector<1x128xf32>
    %4 = vector.broadcast %3 : vector<1x128xf32> to vector<8x128xf32>
    %5 = arith.addf %2, %4 : vector<8x128xf32>
    %cst_5 = arith.constant 0.000000e+00 : f32
    %6 = vector.broadcast %cst_5 : f32 to vector<8x128xf32>
    %7 = arith.maximumf %5, %6 : vector<8x128xf32>
    %8 = tpu.iota {dimensions = array<i32: 1>} : vector<8x128xi32>
    %c64_i32 = arith.constant 64 : i32
    %9 = vector.broadcast %c64_i32 : i32 to vector<8x128xi32>
    %10 = arith.cmpi slt, %8, %9 : vector<8x128xi32>
    %cst_6 = arith.constant 0xFF800000 : f32
    %11 = vector.broadcast %cst_6 : f32 to vector<8x128xf32>
    %12 = arith.select %10, %7, %11 : vector<8x128xi1>, vector<8x128xf32>
    %cst_7 = arith.constant dense<0xFF800000> : vector<8xf32>
    %13 = vector.multi_reduction <maximumf>, %12, %cst_7 [1] : vector<8x128xf32> to vector<8xf32>
    %14 = vector.shape_cast %13 : vector<8xf32> to vector<8x1xf32>
    %15 = vector.broadcast %14 : vector<8x1xf32> to vector<8x128xf32>
    %16 = arith.subf %12, %15 : vector<8x128xf32>
    %17 = math.exp %16 : vector<8x128xf32>
    %cst_8 = arith.constant dense<0.000000e+00> : vector<8xf32>
    %18 = vector.multi_reduction <add>, %17, %cst_8 [1] : vector<8x128xf32> to vector<8xf32>
    %19 = vector.shape_cast %18 : vector<8xf32> to vector<8x1xf32>
    %20 = tpu.reciprocal %19 {approx = true} : vector<8x1xf32> -> vector<8x1xf32>
    %21 = vector.broadcast %20 : vector<8x1xf32> to vector<8x128xf32>
    %22 = arith.mulf %17, %21 : vector<8x128xf32>
    %23 = arith.truncf %22 : vector<8x128xf32> to vector<8x128xbf16>
    %c0_9 = arith.constant 0 : index
    %c0_10 = arith.constant 0 : index
    %24 = vector.load %arg4[%c0_9, %c0_10] : memref<128x128xbf16, #tpu.memory_space<vmem>>, vector<128x128xbf16>
    %cst_11 = arith.constant dense<0.000000e+00> : vector<8x128xf32>
    %25 = tpu.matmul %23, %24, %cst_11 {dimension_numbers = #tpu.dot_dimension_numbers<[1], [0], [0], [1], [0, 0, 1, 1], [], []>} : vector<8x128xbf16>, vector<128x128xbf16>, vector<8x128xf32> -> vector<8x128xf32>
    %c0_12 = arith.constant 0 : index
    %c0_13 = arith.constant 0 : index
    %26 = vector.load %arg5[%c0_12, %c0_13] : memref<1x128xf32, #tpu.memory_space<vmem>>, vector<1x128xf32>
    %27 = vector.broadcast %26 : vector<1x128xf32> to vector<8x128xf32>
    %28 = arith.addf %25, %27 : vector<8x128xf32>
    %c0_14 = arith.constant 0 : index
    %c0_15 = arith.constant 0 : index
    %29 = vector.load %arg6[%c0_14, %c0_15] : memref<8x128xf32, #tpu.memory_space<vmem>>, vector<8x128xf32>
    tpu.vector_store %arg6[%c0_14, %c0_15], %28 {strides = array<i32>} : memref<8x128xf32, #tpu.memory_space<vmem>>, vector<8x128xf32>,
    return
  }
  func.func @transform_0(%arg0: i32) -> (i32, i32) {
    %c0_i32 = arith.constant 0 : i32
    %c0_i32_0 = arith.constant 0 : i32
    return %arg0, %c0_i32 : i32, i32
  }
  func.func @transform_1(%arg0: i32) -> (i32, i32) {
    %c0_i32 = arith.constant 0 : i32
    %c0_i32_0 = arith.constant 0 : i32
    %c0_i32_1 = arith.constant 0 : i32
    return %c0_i32, %c0_i32_0 : i32, i32
  }
  func.func @transform_2(%arg0: i32) -> (i32, i32) {
    %c0_i32 = arith.constant 0 : i32
    %c0_i32_0 = arith.constant 0 : i32
    %c0_i32_1 = arith.constant 0 : i32
    return %c0_i32, %c0_i32_0 : i32, i32
  }
  func.func @transform_3(%arg0: i32) -> (i32, i32) {
    %c0_i32 = arith.constant 0 : i32
    %c0_i32_0 = arith.constant 0 : i32
    %c0_i32_1 = arith.constant 0 : i32
    return %c0_i32, %c0_i32_0 : i32, i32
  }
  func.func @transform_4(%arg0: i32) -> (i32, i32) {
    %c0_i32 = arith.constant 0 : i32
    %c0_i32_0 = arith.constant 0 : i32
    %c0_i32_1 = arith.constant 0 : i32
    return %c0_i32, %c0_i32_0 : i32, i32
  }
  func.func @transform_5(%arg0: i32) -> (i32, i32) {
    %c0_i32 = arith.constant 0 : i32
    %c0_i32_0 = arith.constant 0 : i32
    return %arg0, %c0_i32 : i32, i32
  }
}

</mosaic_0001>

<llo_original>
// kernel: tpu_custom_call.1
$region0: #{tpu_custom_call.1}
  #allocation0 [shape = 'u32[]', space=smem, size = 0x4, offset = 0x4, fixed_abs, tag = 'smem constant byte address 0x4 - core index']
  #allocation1 [shape = 'u32[144,128]{1,0:T(1,128)}', space=vmem, size = 0x12000, scoped, tag = 'internal scratch']
  %s0 = inlined_call_operand.hbm [shape: bf16[8,128], index: 0, kind: input, shape index: {}]
  %s1 = inlined_call_operand.hbm [shape: bf16[128,128], index: 1, kind: input, shape index: {}]
  %s2 = inlined_call_operand.vmem [shape: f32[1,128], index: 2, kind: input, shape index: {}]
  %s3 = inlined_call_operand.hbm [shape: bf16[128,128], index: 3, kind: input, shape index: {}]
  %s4 = inlined_call_operand.vmem [shape: f32[1,128], index: 4, kind: input, shape index: {}]
  %s5 = inlined_call_operand.hbm [shape: f32[8,128], index: 5, kind: output, shape index: {}]
  %s6 = sld [smem:[#allocation0]]
  $region42: #{tpu_custom_call.1} parent=0
    _
  %s8 = ssub.s32 1, %s6
  %s9 = scalar_select 0, %s8, %s6
  $region1: #{tpu_custom_call.1} parent=0
    #allocation2 [shape = 'u8[2048]{0}', space=vmem, size = 0x800, scoped, tag = 'input window, operand 0, single buffered']
    #allocation3 [shape = 's32[1]{0}', space=sflag, size = 0x4, scoped, tag = 'scoped memory for tpu_custom_call.1']
    #allocation4 [shape = 's32[1]{0}', space=sflag, size = 0x4, scoped, tag = 'scoped memory for tpu_custom_call.1']
    #allocation5 [shape = 'u8[32768]{0}', space=vmem, size = 0x8000, scoped, tag = 'input window, operand 1, single buffered']
    #allocation6 [shape = 's32[1]{0}', space=sflag, size = 0x4, scoped, tag = 'scoped memory for tpu_custom_call.1']
    #allocation7 [shape = 'u8[32768]{0}', space=vmem, size = 0x8000, scoped, tag = 'input window, operand 3, single buffered']
    #allocation8 [shape = 'u8[4096]{0}', space=vmem, size = 0x1000, scoped, tag = 'output window, operand 0, single buffered']
    %10 = vsyncpa [#allocation3], 0
    %11 = vsyncpa [#allocation6], 0
    %12 = vsyncpa [#allocation4], 0
    // Predicated region
    $region2: #{tpu_custom_call.1} parent=1 // pred_check
      _
    $region3: #{tpu_custom_call.1} parent=1 // pred_check_branch
      %14 = sbr.rel (0) target = $region5
    $region4: #{tpu_custom_call.1} parent=1 // pred_region
      %s16 = ssub.s32 64, 64
      %17 = vsyncadd [#allocation3], %s16
      %s19 = sshll.u32 [#allocation2], 4
      %s20 = int_to_ptr.vmem [resolvable:$true] %s19
      %22 = dma.hbm_to_vmem [thread:$0]  %s0, 64, %s20, [#allocation3]
    $region5: #{tpu_custom_call.1} parent=1 // pred_fallthru
      _
    // Predicated region
    $region6: #{tpu_custom_call.1} parent=1 // pred_check
      _
    $region7: #{tpu_custom_call.1} parent=1 // pred_check_branch
      %24 = sbr.rel (0) target = $region9
    $region8: #{tpu_custom_call.1} parent=1 // pred_region
      %s26 = ssub.s32 1024, 1024
      %27 = vsyncadd [#allocation6], %s26
      %s28 = sshll.u32 [#allocation5], 4
      %s29 = int_to_ptr.vmem [resolvable:$true] %s28
      %34 = dma.hbm_to_vmem [thread:$0]  %s1, 1024, %s29, [#allocation6], 64, 64, 4
    $region9: #{tpu_custom_call.1} parent=1 // pred_fallthru
      _
    // Predicated region
    $region10: #{tpu_custom_call.1} parent=1 // pred_check
      _
    $region11: #{tpu_custom_call.1} parent=1 // pred_check_branch
      %36 = sbr.rel (0) target = $region13
    $region12: #{tpu_custom_call.1} parent=1 // pred_region
      _
    $region13: #{tpu_custom_call.1} parent=1 // pred_fallthru
      _
    // Predicated region
    $region14: #{tpu_custom_call.1} parent=1 // pred_check
      _
    $region15: #{tpu_custom_call.1} parent=1 // pred_check_branch
      %38 = sbr.rel (0) target = $region17
    $region16: #{tpu_custom_call.1} parent=1 // pred_region
      %s40 = ssub.s32 1024, 1024
      %41 = vsyncadd [#allocation6], %s40
      %s42 = sshll.u32 [#allocation7], 4
      %s43 = int_to_ptr.vmem [resolvable:$true] %s42
      %48 = dma.hbm_to_vmem [thread:$0]  %s3, 1024, %s43, [#allocation6], 64, 64, 4
    $region17: #{tpu_custom_call.1} parent=1 // pred_fallthru
      _
    // Predicated region
    $region18: #{tpu_custom_call.1} parent=1 // pred_check
      _
    $region19: #{tpu_custom_call.1} parent=1 // pred_check_branch
      %50 = sbr.rel (0) target = $region21
    $region20: #{tpu_custom_call.1} parent=1 // pred_region
      _
    $region21: #{tpu_custom_call.1} parent=1 // pred_fallthru
      _
    // Predicated region
    $region22: #{tpu_custom_call.1} parent=1 // pred_check
      _
    $region23: #{tpu_custom_call.1} parent=1 // pred_check_branch
      %52 = sbr.rel (0) target = $region25
    $region24: #{tpu_custom_call.1} parent=1 // pred_region
      %53 = dma.done [#allocation3], 64
    $region25: #{tpu_custom_call.1} parent=1 // pred_fallthru
      _
    // Predicated region
    $region26: #{tpu_custom_call.1} parent=1 // pred_check
      _
    $region27: #{tpu_custom_call.1} parent=1 // pred_check_branch
      %55 = sbr.rel (0) target = $region29
    $region28: #{tpu_custom_call.1} parent=1 // pred_region
      %56 = dma.done [#allocation6], 1024
    $region29: #{tpu_custom_call.1} parent=1 // pred_fallthru
      _
    // Predicated region
    $region30: #{tpu_custom_call.1} parent=1 // pred_check
      _
    $region31: #{tpu_custom_call.1} parent=1 // pred_check_branch
      %58 = sbr.rel (0) target = $region33
    $region32: #{tpu_custom_call.1} parent=1 // pred_region
      %59 = dma.done [#allocation6], 1024
    $region33: #{tpu_custom_call.1} parent=1 // pred_fallthru
      _
    %v61 = vld [vmem:[#allocation2] sm:$0xf]
    %v62 = vld [vmem:[#allocation5] sm:$0xf]
    %v63 = vld [vmem:[#allocation5 + $0x4] sm:$0xf]
    %v64 = vld [vmem:[#allocation5 + $0x8] sm:$0xf]
    %v65 = vld [vmem:[#allocation5 + $0xc] sm:$0xf]
    %v66 = vld [vmem:[#allocation5 + $0x10] sm:$0xf]
    %v67 = vld [vmem:[#allocation5 + $0x14] sm:$0xf]
    %v68 = vld [vmem:[#allocation5 + $0x18] sm:$0xf]
    %v69 = vld [vmem:[#allocation5 + $0x1c] sm:$0xf]
    %v70 = vld [vmem:[#allocation5 + $0x20] sm:$0xf]
    %v71 = vld [vmem:[#allocation5 + $0x24] sm:$0xf]
    %v72 = vld [vmem:[#allocation5 + $0x28] sm:$0xf]
    %v73 = vld [vmem:[#allocation5 + $0x2c] sm:$0xf]
    %v74 = vld [vmem:[#allocation5 + $0x30] sm:$0xf]
    %v75 = vld [vmem:[#allocation5 + $0x34] sm:$0xf]
    %v76 = vld [vmem:[#allocation5 + $0x38] sm:$0xf]
    %v77 = vld [vmem:[#allocation5 + $0x3c] sm:$0xf]
    %v78 = vld [vmem:[%s2] sm:$0x1]
    %v80 = vlaneseq
    %v81 = vshrl.u32 %v80, 7
    %v82 = vsub.s32 0, %v81
    %v83 = vrot.slane %v78, %v82
    %v101 = vunpack.c.l.b16 %v62
    %v102 = vunpack.c.l.b16 %v63
    %v103 = vunpack.c.l.b16 %v64
    %v104 = vunpack.c.l.b16 %v65
    %v105 = vunpack.c.l.b16 %v66
    %v106 = vunpack.c.l.b16 %v67
    %v107 = vunpack.c.l.b16 %v68
    %v108 = vunpack.c.l.b16 %v69
    %v109 = vunpack.c.l.b16 %v70
    %v110 = vunpack.c.l.b16 %v71
    %v111 = vunpack.c.l.b16 %v72
    %v112 = vunpack.c.l.b16 %v73
    %v113 = vunpack.c.l.b16 %v74
    %v114 = vunpack.c.l.b16 %v75
    %v115 = vunpack.c.l.b16 %v76
    %v116 = vunpack.c.l.b16 %v77
    %v117 = vpack.c.b16 %v102, %v101
    %v118 = vpack.c.b16 %v104, %v103
    %v119 = vpack.c.b16 %v106, %v105
    %v120 = vpack.c.b16 %v108, %v107
    %v121 = vpack.c.b16 %v110, %v109
    %v122 = vpack.c.b16 %v112, %v111
    %v123 = vpack.c.b16 %v114, %v113
    %v124 = vpack.c.b16 %v116, %v115
    %133 = vmatprep.subr.bf16.mxu0 0
    %134 = vmatpush1.bf16.msra.mxu0 %v117
    %135 = vmatprep.subr.bf16.mxu0 0
    %136 = vmatpush1.bf16.msra.mxu0 %v118
    %137 = vmatprep.subr.bf16.mxu0 0
    %138 = vmatpush1.bf16.msra.mxu0 %v119
    %139 = vmatprep.subr.bf16.mxu0 0
    %140 = vmatpush1.bf16.msra.mxu0 %v120
    %141 = vmatprep.subr.bf16.mxu0 0
    %142 = vmatpush1.bf16.msra.mxu0 %v121
    %143 = vmatprep.subr.bf16.mxu0 0
    %144 = vmatpush1.bf16.msra.mxu0 %v122
    %145 = vmatprep.subr.bf16.mxu0 0
    %146 = vmatpush1.bf16.msra.mxu0 %v123
    %147 = vmatprep.subr.bf16.mxu0 0
    %148 = vmatpush1.bf16.msra.mxu0 %v124
    %149 = vmatprep.subr.bf16.mxu0 0
    %150 = vmatpush1.bf16.msra.mxu0 0
    %151 = vmatprep.subr.bf16.mxu0 0
    %152 = vmatpush1.bf16.msra.mxu0 0
    %153 = vmatprep.subr.bf16.mxu0 0
    %154 = vmatpush1.bf16.msra.mxu0 0
    %155 = vmatprep.subr.bf16.mxu0 0
    %156 = vmatpush1.bf16.msra.mxu0 0
    %157 = vmatprep.subr.bf16.mxu0 0
    %158 = vmatpush1.bf16.msra.mxu0 0
    %159 = vmatprep.subr.bf16.mxu0 0
    %160 = vmatpush1.bf16.msra.mxu0 0
    %161 = vmatprep.subr.bf16.mxu0 0
    %162 = vmatpush1.bf16.msra.mxu0 0
    %163 = vmatprep.subr.bf16.mxu0 0
    %164 = vmatpush1.bf16.msra.mxu0 0
    %165 = vmatprep.mubr.bf16.mxu0 0
    %166 = vmatmul.mubr.bf16.gmra.mrb[0].mxu0 %v61
    %v167 = vpop.f32.mrb[0].mxu0
    %v168 = vadd.f32 %v83, %v167
    %v169 = vpop.f32.mrb[0].mxu0
    %v170 = vpop.f32.mrb[0].mxu0
    %v171 = vpop.f32.mrb[0].mxu0
    %172 = vdwg.mxu0
    %v173 = vmax.f32 %v168, 0.0
    %v174 = vlaneseq
    %v175 = vand.u32 %v174, 127
    %vm176 = vcmp.lt.s32.totalorder %v175, 64
    %v177 = vsel %vm176, %v173, -inf
    %178 = vmax.xlane.f32.xlu0 %v177
    %v179 = vpop.xlane.xlu0 %178
    %v180 = vsub.f32 %v177, %v179
    %v181 = vmul.f32 %v180, 1.442695
    %v182 = vpow.pop %v181
    %183 = vadd.xlane.f32.xlu0 %v182
    %v184 = vpop.xlane.xlu0 %183
    %v185 = vrcp.pop %v184
    %v186 = vmul.f32 %v182, %v185
    %v187 = vpack.c.bf16 %v186, %v186
    %v188 = vld [vmem:[#allocation7] sm:$0xf]
    %v189 = vld [vmem:[#allocation7 + $0x4] sm:$0xf]
    %v190 = vld [vmem:[#allocation7 + $0x8] sm:$0xf]
    %v191 = vld [vmem:[#allocation7 + $0xc] sm:$0xf]
    %v192 = vld [vmem:[#allocation7 + $0x10] sm:$0xf]
    %v193 = vld [vmem:[#allocation7 + $0x14] sm:$0xf]
    %v194 = vld [vmem:[#allocation7 + $0x18] sm:$0xf]
    %v195 = vld [vmem:[#allocation7 + $0x1c] sm:$0xf]
    %v196 = vld [vmem:[#allocation7 + $0x20] sm:$0xf]
    %v197 = vld [vmem:[#allocation7 + $0x24] sm:$0xf]
    %v198 = vld [vmem:[#allocation7 + $0x28] sm:$0xf]
    %v199 = vld [vmem:[#allocation7 + $0x2c] sm:$0xf]
    %v200 = vld [vmem:[#allocation7 + $0x30] sm:$0xf]
    %v201 = vld [vmem:[#allocation7 + $0x34] sm:$0xf]
    %v202 = vld [vmem:[#allocation7 + $0x38] sm:$0xf]
    %v203 = vld [vmem:[#allocation7 + $0x3c] sm:$0xf]
    %v204 = vld [vmem:[%s4] sm:$0x1]
    %v206 = vlaneseq
    %v207 = vshrl.u32 %v206, 7
    %v208 = vsub.s32 0, %v207
    %v209 = vrot.slane %v204, %v208
    %v227 = vunpack.c.l.b16 %v188
    %v228 = vunpack.c.l.b16 %v189
    %v229 = vunpack.c.l.b16 %v190
    %v230 = vunpack.c.l.b16 %v191
    %v231 = vunpack.c.l.b16 %v192
    %v232 = vunpack.c.l.b16 %v193
    %v233 = vunpack.c.l.b16 %v194
    %v234 = vunpack.c.l.b16 %v195
    %v235 = vunpack.c.l.b16 %v196
    %v236 = vunpack.c.l.b16 %v197
    %v237 = vunpack.c.l.b16 %v198
    %v238 = vunpack.c.l.b16 %v199
    %v239 = vunpack.c.l.b16 %v200
    %v240 = vunpack.c.l.b16 %v201
    %v241 = vunpack.c.l.b16 %v202
    %v242 = vunpack.c.l.b16 %v203
    %v243 = vpack.c.b16 %v228, %v227
    %v244 = vpack.c.b16 %v230, %v229
    %v245 = vpack.c.b16 %v232, %v231
    %v246 = vpack.c.b16 %v234, %v233
    %v247 = vpack.c.b16 %v236, %v235
    %v248 = vpack.c.b16 %v238, %v237
    %v249 = vpack.c.b16 %v240, %v239
    %v250 = vpack.c.b16 %v242, %v241
    %259 = vmatprep.subr.bf16.mxu0 0
    %260 = vmatpush1.bf16.msra.mxu0 %v243
    %261 = vmatprep.subr.bf16.mxu0 0
    %262 = vmatpush1.bf16.msra.mxu0 %v244
    %263 = vmatprep.subr.bf16.mxu0 0
    %264 = vmatpush1.bf16.msra.mxu0 %v245
    %265 = vmatprep.subr.bf16.mxu0 0
    %266 = vmatpush1.bf16.msra.mxu0 %v246
    %267 = vmatprep.subr.bf16.mxu0 0
    %268 = vmatpush1.bf16.msra.mxu0 %v247
    %269 = vmatprep.subr.bf16.mxu0 0
    %270 = vmatpush1.bf16.msra.mxu0 %v248
    %271 = vmatprep.subr.bf16.mxu0 0
    %272 = vmatpush1.bf16.msra.mxu0 %v249
    %273 = vmatprep.subr.bf16.mxu0 0
    %274 = vmatpush1.bf16.msra.mxu0 %v250
    %275 = vmatprep.subr.bf16.mxu0 0
    %276 = vmatpush1.bf16.msra.mxu0 0
    %277 = vmatprep.subr.bf16.mxu0 0
    %278 = vmatpush1.bf16.msra.mxu0 0
    %279 = vmatprep.subr.bf16.mxu0 0
    %280 = vmatpush1.bf16.msra.mxu0 0
    %281 = vmatprep.subr.bf16.mxu0 0
    %282 = vmatpush1.bf16.msra.mxu0 0
    %283 = vmatprep.subr.bf16.mxu0 0
    %284 = vmatpush1.bf16.msra.mxu0 0
    %285 = vmatprep.subr.bf16.mxu0 0
    %286 = vmatpush1.bf16.msra.mxu0 0
    %287 = vmatprep.subr.bf16.mxu0 0
    %288 = vmatpush1.bf16.msra.mxu0 0
    %289 = vmatprep.subr.bf16.mxu0 0
    %290 = vmatpush1.bf16.msra.mxu0 0
    %291 = vmatprep.mubr.bf16.mxu0 0
    %292 = vmatmul.mubr.bf16.gmra.mrb[0].mxu0 %v187
    %v293 = vpop.f32.mrb[0].mxu0
    %v294 = vadd.f32 %v209, %v293
    %v295 = vpop.f32.mrb[0].mxu0
    %v296 = vpop.f32.mrb[0].mxu0
    %v297 = vpop.f32.mrb[0].mxu0
    %298 = vdwg.mxu0
    %299 = vst [vmem:[#allocation8] sm:$0xff] %v294
    // Predicated region
    $region34: #{tpu_custom_call.1} parent=1 // pred_check
      _
    $region35: #{tpu_custom_call.1} parent=1 // pred_check_branch
      %301 = sbr.rel (0) target = $region37
    $region36: #{tpu_custom_call.1} parent=1 // pred_region
      %s303 = ssub.s32 128, 128
      %304 = vsyncadd [#allocation4], %s303
      %s306 = sshll.u32 [#allocation8], 4
      %s307 = int_to_ptr.vmem [resolvable:$true] %s306
      %309 = dma.vmem_to_hbm [thread:$0]  %s307, 128, %s5, [#allocation4]
    $region37: #{tpu_custom_call.1} parent=1 // pred_fallthru
      _
    // Predicated region
    $region38: #{tpu_custom_call.1} parent=1 // pred_check
      _
    $region39: #{tpu_custom_call.1} parent=1 // pred_check_branch
      %311 = sbr.rel (0) target = $region41
    $region40: #{tpu_custom_call.1} parent=1 // pred_region
      %312 = dma.done [#allocation4], 128
    $region41: #{tpu_custom_call.1} parent=1 // pred_fallthru
      _
    %313 = vsyncpa [#allocation3], 1
    %314 = vsyncpa [#allocation6], 1
    %315 = vsyncpa [#allocation4], 1

</llo_original>
